<compile_context>
chip_gen: v5e
topology: v5e:2x2
jax: 0.10.0
libtpu: 0.0.40
codegen_flags: <defaults>
</compile_context>

<pallas_src>
import jax
import jax.numpy as jnp
from jax.experimental import pallas as pl
from jax.experimental.pallas import tpu as pltpu


LANE = 128
_EPS = 1e-5


def _round_up(x, m):
    return ((x + m - 1) // m) * m


def _physical_vmem_bytes():
    """Best-effort query of per-core VMEM capacity; conservative fallback."""
    try:
        info = pltpu.get_tpu_info()
        v = getattr(info, "vmem_capacity_bytes", None)
        if v:
            return int(v)
    except Exception:
        pass
    return 64 << 20  # assume v7x-sized VMEM if we cannot query


def _make_kernel(d_model):
    """Fused FFN (d_ff-sliced) + residual + LayerNorm kernel."""
    inv_n = 1.0 / float(d_model)

    def kernel(x_ref, w1_ref, w2_ref, o_ref, acc_ref):
        # x_ref : (tm, d_model_p)  token rows, input dtype (padded lanes == 0)
        # w1_ref: (d_model_p, tf)  slice of W1 (columns j*tf : (j+1)*tf)
        # w2_ref: (tf, d_model_p)  matching slice of W2 rows
        # acc_ref: (tm, d_model_p) f32 accumulator for ReLU(x@W1) @ W2
        j = pl.program_id(1)

        @pl.when(j == 0)
        def _():
            acc_ref[...] = jnp.zeros_like(acc_ref)

        x = x_ref[...]

        # fc[0] slice: Linear(d_model -> tf, no bias) + ReLU (elementwise, so
        # per-slice ReLU is exact).  Operands in input dtype, f32 MXU accum.
        h = jnp.dot(x, w1_ref[...], preferred_element_type=jnp.float32)
        h = jnp.maximum(h, 0.0).astype(x.dtype)

        # fc[2] slice: partial Linear(tf -> d_model, no bias), accumulate f32.
        acc_ref[...] += jnp.dot(h, w2_ref[...], preferred_element_type=jnp.float32)

        @pl.when(j == pl.num_programs(1) - 1)
        def _():
            # Residual + LayerNorm (eps=1e-5, identity affine) in f32.
            # Padded lanes of x and of the accumulated FFN output are exactly
            # zero, so sums over the padded width equal sums over d_model.
            z = acc_ref[...] + x.astype(jnp.float32)
            mean = jnp.sum(z, axis=-1, keepdims=True) * inv_n
            msq = jnp.sum(z * z, axis=-1, keepdims=True) * inv_n
            var = msq - mean * mean
            o_ref[...] = ((z - mean) * jax.lax.rsqrt(var + _EPS)).astype(o_ref.dtype)

    return kernel


def poswise_ffn(x, w1, w2, *, vmem_budget_bytes=None):
    """x: [batch, seq, d_model]; w1: [d_model, d_ff]; w2: [d_ff, d_model]."""
    batch, seq, d_model = x.shape
    d_ff = w1.shape[1]
    assert w1.shape == (d_model, d_ff) and w2.shape == (d_ff, d_model)

    d_model_p = _round_up(d_model, LANE)
    d_ff_p = _round_up(d_ff, LANE)

    M = batch * seq
    x2d = x.reshape(M, d_model)

    # Zero-pad lane dims to 128 multiples (dense lanes / full MXU columns).
    # TODO(synk): for repeated calls, pre-pad the weights once outside the
    # wrapper instead of re-padding every forward.
    if d_model_p != d_model:
        x2d = jnp.pad(x2d, ((0, 0), (0, d_model_p - d_model)))
    if (d_model_p, d_ff_p) != (d_model, d_ff):
        w1p = jnp.pad(w1, ((0, d_model_p - d_model), (0, d_ff_p - d_ff)))
        w2p = jnp.pad(w2, ((0, d_ff_p - d_ff), (0, d_model_p - d_model)))
    else:
        w1p, w2p = w1, w2

    itemsize = jnp.dtype(x.dtype).itemsize
    sublane = 8 if itemsize >= 4 else 16  # f32 -> 8, bf16/int8 -> 16

    # ---- generation-aware VMEM budget -------------------------------------
    phys_vmem = _physical_vmem_bytes()
    if vmem_budget_bytes is None:
        # v7x (64 MiB) -> ~40 MiB tile budget; v5e/v6e (128 MiB) -> ~104 MiB.
        budget = max(phys_vmem - (24 << 20), 24 << 20)
    else:
        budget = int(vmem_budget_bytes)

    # Per-step VMEM footprint: double-buffered x/out tiles and W1/W2 slices,
    # f32 accumulator scratch, f32 hidden slice + cast, LayerNorm temporaries.
    def vmem_estimate(tm, tf):
        weights = 2 * 2 * d_model_p * tf * itemsize        # W1 + W2 slices, 2 bufs
        io = 2 * 2 * tm * d_model_p * itemsize             # x tile + out tile
        acc = tm * d_model_p * 4                           # f32 accumulator scratch
        hidden = tm * tf * (4 + itemsize)                  # f32 dot result + cast
        ln_tmp = 2 * tm * d_model_p * 4                    # residual / normalized
        return weights + io + acc + hidden + ln_tmp

    # ---- tile selection -----------------------------------------------------
    M_su = _round_up(M, sublane)
    # Keep >=2 row tiles when there are enough rows (v7x: 2 TCs to shard over).
    row_cap = _round_up((M_su + 1) // 2, 256) if M_su >= 512 else M_su

    tm_cands = sorted(
        {t for t in (1024, 768, 512, 256, 128, 64, 32, 16, 8, row_cap)
         if t % sublane == 0 and t <= row_cap},
        reverse=True)
    tf_cands = sorted(
        {t for t in (d_ff_p, 4096, 2048, 1024, 512, 256, 128)
         if t <= d_ff_p and d_ff_p % t == 0},
        reverse=True)

    tm = tf = None
    for cand_m in tm_cands:          # prefer big row tiles (amortize weight DMA)
        for cand_f in tf_cands:      # then the biggest d_ff slice that fits
            if vmem_estimate(cand_m, cand_f) <= budget:
                tm, tf = cand_m, cand_f
                break
        if tm is not None:
            break
    if tm is None:
        raise ValueError(
            f"PoswiseFeedForwardNet kernel: no tile configuration fits the "
            f"VMEM budget ({budget} bytes); d_model_p={d_model_p} is too wide "
            f"without an additional d_model tiling axis.")

    # Zero-pad rows so the row grid divides evenly (padded rows produce finite
    # values that are sliced away below).
    M_pad = _round_up(M, tm)
    if M_pad != M:
        x2d = jnp.pad(x2d, ((0, M_pad - M), (0, 0)))

    est = vmem_estimate(tm, tf)
    vmem_limit = int(min(max(est + (8 << 20), 32 << 20), phys_vmem - (16 << 20)))
    vmem_limit = max(vmem_limit, est + (4 << 20))  # never clamp below estimate

    grid = (M_pad // tm, d_ff_p // tf)

    out2d = pl.pallas_call(
        _make_kernel(d_model),
        out_shape=jax.ShapeDtypeStruct((M_pad, d_model_p), x.dtype),
        grid_spec=pltpu.PrefetchScalarGridSpec(
            num_scalar_prefetch=0,
            grid=grid,
            in_specs=[
                pl.BlockSpec((tm, d_model_p), lambda i, j: (i, 0)),   # x rows (resident over j)
                pl.BlockSpec((d_model_p, tf), lambda i, j: (0, j)),   # W1 column slice
                pl.BlockSpec((tf, d_model_p), lambda i, j: (j, 0)),   # W2 row slice
            ],
            out_specs=pl.BlockSpec((tm, d_model_p), lambda i, j: (i, 0)),
            scratch_shapes=[pltpu.VMEM((tm, d_model_p), jnp.float32)],
        ),
        compiler_params=pltpu.CompilerParams(
            dimension_semantics=("parallel", "arbitrary"),
            vmem_limit_bytes=vmem_limit,
        ),
    )(x2d, w1p, w2p)

    if M_pad != M or d_model_p != d_model:
        out2d = out2d[:M, :d_model]
    return out2d.reshape(batch, seq, d_model)


def reference(x, w1, w2):
    y = jnp.maximum(x @ w1, 0.0) @ w2 + x
    mean = jnp.mean(y, axis=-1, keepdims=True)
    var = jnp.mean((y - mean) ** 2, axis=-1, keepdims=True)
    return (y - mean) * jax.lax.rsqrt(var + _EPS)


if __name__ == "__main__":
    batch, seq, d_model, d_ff = 2, 8, 32, 64

    key = jax.random.PRNGKey(0)
    kx, k1, k2 = jax.random.split(key, 3)

    x = jax.random.normal(kx, (batch, seq, d_model), dtype=jnp.float32)
    # deterministic "Linear" weights (kaiming-uniform-like bound, no bias)
    b1 = 1.0 / (d_model ** 0.5)
    b2 = 1.0 / (d_ff ** 0.5)
    w1 = jax.random.uniform(k1, (d_model, d_ff), jnp.float32, -b1, b1)
    w2 = jax.random.uniform(k2, (d_ff, d_model), jnp.float32, -b2, b2)

    out = poswise_ffn(x, w1, w2)
    out = jax.block_until_ready(out)

    ref = reference(x, w1, w2)
    assert out.shape == (batch, seq, d_model)
    assert jnp.allclose(out, ref, atol=1e-4, rtol=1e-4), "mismatch vs reference"

    print("KERNEL_OK")
</pallas_src>

<mosaic_0001>
module attributes {stable_mosaic.version = 11 : i64} {
  func.func @kernel(%arg0: i32, %arg1: i32, %arg2: memref<16x128xf32, #tpu.memory_space<vmem>>, %arg3: memref<128x128xf32, #tpu.memory_space<vmem>>, %arg4: memref<128x128xf32, #tpu.memory_space<vmem>>, %arg5: memref<16x128xf32, #tpu.memory_space<vmem>>, %arg6: memref<16x128xf32, #tpu.memory_space<vmem>>) attributes {dimension_semantics = [#tpu.dimension_semantics<parallel>, #tpu.dimension_semantics<arbitrary>], iteration_bounds = array<i64: 1, 1>, scalar_prefetch = 0 : i64, scratch_operands = 1 : i64, tpu.core_type = #tpu.core_type<tc>, window_params = [{transform_indices = @transform_0, window_bounds = array<i64: 16, 128>}, {transform_indices = @transform_1, window_bounds = array<i64: 128, 128>}, {transform_indices = @transform_2, window_bounds = array<i64: 128, 128>}, {transform_indices = @transform_3, window_bounds = array<i64: 16, 128>}]} {
    %c0_i32 = arith.constant 0 : i32
    %0 = arith.cmpi eq, %arg1, %c0_i32 : i32
    %1 = arith.extui %0 : i1 to i32
    %c0_i32_0 = arith.constant 0 : i32
    %2 = arith.cmpi ne, %1, %c0_i32_0 : i32
    scf.if %2 {
      %cst_14 = arith.constant 0.000000e+00 : f32
      %16 = vector.broadcast %cst_14 : f32 to vector<16x128xf32>
      %c0_15 = arith.constant 0 : index
      %c0_16 = arith.constant 0 : index
      %17 = vector.load %arg6[%c0_15, %c0_16] : memref<16x128xf32, #tpu.memory_space<vmem>>, vector<16x128xf32>
      tpu.vector_store %arg6[%c0_15, %c0_16], %16 {strides = array<i32>} : memref<16x128xf32, #tpu.memory_space<vmem>>, vector<16x128xf32>,
    } else {
    }
    %c0 = arith.constant 0 : index
    %c0_1 = arith.constant 0 : index
    %3 = vector.load %arg2[%c0, %c0_1] : memref<16x128xf32, #tpu.memory_space<vmem>>, vector<16x128xf32>
    %c0_2 = arith.constant 0 : index
    %c0_3 = arith.constant 0 : index
    %4 = vector.load %arg3[%c0_2, %c0_3] : memref<128x128xf32, #tpu.memory_space<vmem>>, vector<128x128xf32>
    %cst = arith.constant dense<0.000000e+00> : vector<16x128xf32>
    %5 = tpu.matmul %3, %4, %cst {dimension_numbers = #tpu.dot_dimension_numbers<[1], [0], [0], [1], [0, 0, 1, 1], [], []>} : vector<16x128xf32>, vector<128x128xf32>, vector<16x128xf32> -> vector<16x128xf32>
    %cst_4 = arith.constant 0.000000e+00 : f32
    %6 = vector.broadcast %cst_4 : f32 to vector<16x128xf32>
    %7 = arith.maximumf %5, %6 : vector<16x128xf32>
    %c0_5 = arith.constant 0 : index
    %c0_6 = arith.constant 0 : index
    %8 = vector.load %arg6[%c0_5, %c0_6] : memref<16x128xf32, #tpu.memory_space<vmem>>, vector<16x128xf32>
    %c0_7 = arith.constant 0 : index
    %c0_8 = arith.constant 0 : index
    %9 = vector.load %arg4[%c0_7, %c0_8] : memref<128x128xf32, #tpu.memory_space<vmem>>, vector<128x128xf32>
    %cst_9 = arith.constant dense<0.000000e+00> : vector<16x128xf32>
    %10 = tpu.matmul %7, %9, %cst_9 {dimension_numbers = #tpu.dot_dimension_numbers<[1], [0], [0], [1], [0, 0, 1, 1], [], []>} : vector<16x128xf32>, vector<128x128xf32>, vector<16x128xf32> -> vector<16x128xf32>
    %11 = arith.addf %8, %10 : vector<16x128xf32>
    %c0_10 = arith.constant 0 : index
    %c0_11 = arith.constant 0 : index
    %12 = vector.load %arg6[%c0_10, %c0_11] : memref<16x128xf32, #tpu.memory_space<vmem>>, vector<16x128xf32>
    tpu.vector_store %arg6[%c0_10, %c0_11], %11 {strides = array<i32>} : memref<16x128xf32, #tpu.memory_space<vmem>>, vector<16x128xf32>,
    %c0_i32_12 = arith.constant 0 : i32
    %13 = arith.cmpi eq, %arg1, %c0_i32_12 : i32
    %14 = arith.extui %13 : i1 to i32
    %c0_i32_13 = arith.constant 0 : i32
    %15 = arith.cmpi ne, %14, %c0_i32_13 : i32
    scf.if %15 {
      %c0_14 = arith.constant 0 : index
      %c0_15 = arith.constant 0 : index
      %16 = vector.load %arg6[%c0_14, %c0_15] : memref<16x128xf32, #tpu.memory_space<vmem>>, vector<16x128xf32>
      %17 = arith.addf %16, %3 : vector<16x128xf32>
      %cst_16 = arith.constant dense<0.000000e+00> : vector<16xf32>
      %18 = vector.multi_reduction <add>, %17, %cst_16 [1] : vector<16x128xf32> to vector<16xf32>
      %19 = vector.shape_cast %18 : vector<16xf32> to vector<16x1xf32>
      %cst_17 = arith.constant 3.125000e-02 : f32
      %20 = vector.broadcast %cst_17 : f32 to vector<16x1xf32>
      %21 = arith.mulf %19, %20 : vector<16x1xf32>
      %22 = arith.mulf %17, %17 : vector<16x128xf32>
      %cst_18 = arith.constant dense<0.000000e+00> : vector<16xf32>
      %23 = vector.multi_reduction <add>, %22, %cst_18 [1] : vector<16x128xf32> to vector<16xf32>
      %24 = vector.shape_cast %23 : vector<16xf32> to vector<16x1xf32>
      %cst_19 = arith.constant 3.125000e-02 : f32
      %25 = vector.broadcast %cst_19 : f32 to vector<16x1xf32>
      %26 = arith.mulf %24, %25 : vector<16x1xf32>
      %27 = arith.mulf %21, %21 : vector<16x1xf32>
      %28 = arith.subf %26, %27 : vector<16x1xf32>
      %29 = vector.broadcast %21 : vector<16x1xf32> to vector<16x128xf32>
      %30 = arith.subf %17, %29 : vector<16x128xf32>
      %cst_20 = arith.constant 9.99999974E-6 : f32
      %31 = vector.broadcast %cst_20 : f32 to vector<16x1xf32>
      %32 = arith.addf %28, %31 : vector<16x1xf32>
      %33 = math.rsqrt %32 : vector<16x1xf32>
      %34 = vector.broadcast %33 : vector<16x1xf32> to vector<16x128xf32>
      %35 = arith.mulf %30, %34 : vector<16x128xf32>
      %c0_21 = arith.constant 0 : index
      %c0_22 = arith.constant 0 : index
      %36 = vector.load %arg5[%c0_21, %c0_22] : memref<16x128xf32, #tpu.memory_space<vmem>>, vector<16x128xf32>
      tpu.vector_store %arg5[%c0_21, %c0_22], %35 {strides = array<i32>} : memref<16x128xf32, #tpu.memory_space<vmem>>, vector<16x128xf32>,
    } else {
    }
    return
  }
  func.func @transform_0(%arg0: i32, %arg1: i32) -> (i32, i32) {
    %c0_i32 = arith.constant 0 : i32
    %c0_i32_0 = arith.constant 0 : i32
    return %arg0, %c0_i32 : i32, i32
  }
  func.func @transform_1(%arg0: i32, %arg1: i32) -> (i32, i32) {
    %c0_i32 = arith.constant 0 : i32
    %c0_i32_0 = arith.constant 0 : i32
    return %c0_i32, %arg1 : i32, i32
  }
  func.func @transform_2(%arg0: i32, %arg1: i32) -> (i32, i32) {
    %c0_i32 = arith.constant 0 : i32
    %c0_i32_0 = arith.constant 0 : i32
    return %arg1, %c0_i32 : i32, i32
  }
  func.func @transform_3(%arg0: i32, %arg1: i32) -> (i32, i32) {
    %c0_i32 = arith.constant 0 : i32
    %c0_i32_0 = arith.constant 0 : i32
    return %arg0, %c0_i32 : i32, i32
  }
}

</mosaic_0001>

<llo_original>
// kernel: tpu_custom_call.1
$region0: #{tpu_custom_call.1}
  #allocation0 [shape = 'u32[]', space=smem, size = 0x4, offset = 0x4, fixed_abs, tag = 'smem constant byte address 0x4 - core index']
  #allocation1 [shape = 'u32[72,128]{1,0:T(1,128)}', space=vmem, size = 0x9000, scoped, tag = 'internal scratch']
  #allocation2 [shape = 'f32[16,128]{1,0:T(8,128)}', space=vmem, size = 0x2000, scoped, tag = 'scratch operand']
  %s0 = inlined_call_operand.hbm [shape: f32[16,128], index: 0, kind: input, shape index: {}]
  %s1 = inlined_call_operand.hbm [shape: f32[128,128], index: 1, kind: input, shape index: {}]
  %s2 = inlined_call_operand.hbm [shape: f32[128,128], index: 2, kind: input, shape index: {}]
  %s3 = inlined_call_operand.hbm [shape: f32[16,128], index: 3, kind: output, shape index: {}]
  %s4 = sld [smem:[#allocation0]]
  $region42: #{tpu_custom_call.1} parent=0
    _
  %s6 = ssub.s32 1, %s4
  %s7 = scalar_select 0, %s6, %s4
  $region1: #{tpu_custom_call.1} parent=0
    #allocation3 [shape = 'u8[8192]{0}', space=vmem, size = 0x2000, scoped, tag = 'input window, operand 0, single buffered']
    #allocation4 [shape = 's32[1]{0}', space=sflag, size = 0x4, scoped, tag = 'scoped memory for tpu_custom_call.1']
    #allocation5 [shape = 's32[1]{0}', space=sflag, size = 0x4, scoped, tag = 'scoped memory for tpu_custom_call.1']
    #allocation6 [shape = 'u8[65536]{0}', space=vmem, size = 0x10000, scoped, tag = 'input window, operand 1, single buffered']
    #allocation7 [shape = 's32[1]{0}', space=sflag, size = 0x4, scoped, tag = 'scoped memory for tpu_custom_call.1']
    #allocation8 [shape = 'u8[65536]{0}', space=vmem, size = 0x10000, scoped, tag = 'input window, operand 2, single buffered']
    #allocation9 [shape = 'u8[8192]{0}', space=vmem, size = 0x2000, scoped, tag = 'output window, operand 0, single buffered']
    %8 = vsyncpa [#allocation4], 0
    %9 = vsyncpa [#allocation7], 0
    %10 = vsyncpa [#allocation5], 0
    // Predicated region
    $region2: #{tpu_custom_call.1} parent=1 // pred_check
      _
    $region3: #{tpu_custom_call.1} parent=1 // pred_check_branch
      %12 = sbr.rel (0) target = $region5
    $region4: #{tpu_custom_call.1} parent=1 // pred_region
      %14 = vsyncadd [#allocation4], 0
      %s15 = sshll.u32 %s0, 4
      %s16 = int_to_ptr.hbm [resolvable:$true] %s15
      %s17 = sshll.u32 [#allocation3], 4
      %s18 = int_to_ptr.vmem [resolvable:$true] %s17
      %23 = dma.hbm_to_vmem [thread:$0]  %s16, 256, %s18, [#allocation4], 128, 128, 8
    $region5: #{tpu_custom_call.1} parent=1 // pred_fallthru
      _
    // Predicated region
    $region6: #{tpu_custom_call.1} parent=1 // pred_check
      _
    $region7: #{tpu_custom_call.1} parent=1 // pred_check_branch
      %25 = sbr.rel (0) target = $region9
    $region8: #{tpu_custom_call.1} parent=1 // pred_region
      %27 = vsyncadd [#allocation7], 0
      %s28 = sshll.u32 %s1, 4
      %s29 = int_to_ptr.hbm [resolvable:$true] %s28
      %s30 = sshll.u32 [#allocation6], 4
      %s31 = int_to_ptr.vmem [resolvable:$true] %s30
      %36 = dma.hbm_to_vmem [thread:$0]  %s29, 2048, %s31, [#allocation7], 128, 128, 8
    $region9: #{tpu_custom_call.1} parent=1 // pred_fallthru
      _
    // Predicated region
    $region10: #{tpu_custom_call.1} parent=1 // pred_check
      _
    $region11: #{tpu_custom_call.1} parent=1 // pred_check_branch
      %38 = sbr.rel (0) target = $region13
    $region12: #{tpu_custom_call.1} parent=1 // pred_region
      %40 = vsyncadd [#allocation7], 0
      %s41 = sshll.u32 %s2, 4
      %s42 = int_to_ptr.hbm [resolvable:$true] %s41
      %s43 = sshll.u32 [#allocation8], 4
      %s44 = int_to_ptr.vmem [resolvable:$true] %s43
      %49 = dma.hbm_to_vmem [thread:$0]  %s42, 2048, %s44, [#allocation7], 128, 128, 8
    $region13: #{tpu_custom_call.1} parent=1 // pred_fallthru
      _
    // Predicated region
    $region14: #{tpu_custom_call.1} parent=1 // pred_check
      _
    $region15: #{tpu_custom_call.1} parent=1 // pred_check_branch
      %51 = sbr.rel (0) target = $region17
    $region16: #{tpu_custom_call.1} parent=1 // pred_region
      %53 = dma.done [#allocation4], 256
    $region17: #{tpu_custom_call.1} parent=1 // pred_fallthru
      _
    // Predicated region
    $region18: #{tpu_custom_call.1} parent=1 // pred_check
      _
    $region19: #{tpu_custom_call.1} parent=1 // pred_check_branch
      %55 = sbr.rel (0) target = $region21
    $region20: #{tpu_custom_call.1} parent=1 // pred_region
      %57 = dma.done [#allocation7], 2048
    $region21: #{tpu_custom_call.1} parent=1 // pred_fallthru
      _
    // Predicated region
    $region22: #{tpu_custom_call.1} parent=1 // pred_check
      _
    $region23: #{tpu_custom_call.1} parent=1 // pred_check_branch
      %59 = sbr.rel (0) target = $region25
    $region24: #{tpu_custom_call.1} parent=1 // pred_region
      %61 = dma.done [#allocation7], 2048
    $region25: #{tpu_custom_call.1} parent=1 // pred_fallthru
      _
    %p62 = scmp.eq.s32.totalorder 0, 0
    // Predicated region
    $region26: #{tpu_custom_call.1} parent=1 // pred_check
      %p63 = pneg %p62
    $region27: #{tpu_custom_call.1} parent=1 // pred_check_branch
      %65 = sbr.rel (%p63) target = $region29
    $region28: #{tpu_custom_call.1} parent=1 // pred_region
      %66 = vst [vmem:[#allocation2] sm:$0xff] 0.0
      %67 = vst [vmem:[#allocation2 + $0x8] sm:$0xff] 0.0
    $region29: #{tpu_custom_call.1} parent=1 // pred_fallthru
      _
    %v68 = vld [vmem:[#allocation3] sm:$0xff]
    %v69 = vld [vmem:[#allocation3 + $0x8] sm:$0xff]
    %v70 = vld [vmem:[#allocation6] sm:$0xff]
    %v71 = vld [vmem:[#allocation6 + $0x8] sm:$0xff]
    %v72 = vld [vmem:[#allocation6 + $0x10] sm:$0xff]
    %v73 = vld [vmem:[#allocation6 + $0x18] sm:$0xff]
    %v74 = vld [vmem:[#allocation6 + $0x20] sm:$0xff]
    %v75 = vld [vmem:[#allocation6 + $0x28] sm:$0xff]
    %v76 = vld [vmem:[#allocation6 + $0x30] sm:$0xff]
    %v77 = vld [vmem:[#allocation6 + $0x38] sm:$0xff]
    %v78 = vld [vmem:[#allocation6 + $0x40] sm:$0xff]
    %v79 = vld [vmem:[#allocation6 + $0x48] sm:$0xff]
    %v80 = vld [vmem:[#allocation6 + $0x50] sm:$0xff]
    %v81 = vld [vmem:[#allocation6 + $0x58] sm:$0xff]
    %v82 = vld [vmem:[#allocation6 + $0x60] sm:$0xff]
    %v83 = vld [vmem:[#allocation6 + $0x68] sm:$0xff]
    %v84 = vld [vmem:[#allocation6 + $0x70] sm:$0xff]
    %v85 = vld [vmem:[#allocation6 + $0x78] sm:$0xff]
    %86 = vmatpush.msra.mxu0 %v85
    %87 = vmatpush.msra.mxu0 %v84
    %88 = vmatpush.msra.mxu0 %v83
    %89 = vmatpush.msra.mxu0 %v82
    %90 = vmatpush.msra.mxu0 %v81
    %91 = vmatpush.msra.mxu0 %v80
    %92 = vmatpush.msra.mxu0 %v79
    %93 = vmatpush.msra.mxu0 %v78
    %94 = vmatpush.msra.mxu0 %v77
    %95 = vmatpush.msra.mxu0 %v76
    %96 = vmatpush.msra.mxu0 %v75
    %97 = vmatpush.msra.mxu0 %v74
    %98 = vmatpush.msra.mxu0 %v73
    %99 = vmatpush.msra.mxu0 %v72
    %100 = vmatpush.msra.mxu0 %v71
    %101 = vmatpush.msra.mxu0 %v70
    %102 = vmatmul.f32.gmra.mxu0 %v68
    %v103 = vpop.f32.mrf.mxu0
    %v104 = vadd.f32 0.0, %v103
    %105 = vmatmul.f32.gmra.mxu0 %v69
    %v106 = vpop.f32.mrf.mxu0
    %v107 = vadd.f32 0.0, %v106
    %108 = vdwg.mxu0
    %v109 = vmax.f32 %v104, 0.0
    %v110 = vmax.f32 %v107, 0.0
    %v111 = vld [vmem:[#allocation2] sm:$0xff]
    %v112 = vld [vmem:[#allocation2 + $0x8] sm:$0xff]
    %v113 = vld [vmem:[#allocation8] sm:$0xff]
    %v114 = vld [vmem:[#allocation8 + $0x8] sm:$0xff]
    %v115 = vld [vmem:[#allocation8 + $0x10] sm:$0xff]
    %v116 = vld [vmem:[#allocation8 + $0x18] sm:$0xff]
    %v117 = vld [vmem:[#allocation8 + $0x20] sm:$0xff]
    %v118 = vld [vmem:[#allocation8 + $0x28] sm:$0xff]
    %v119 = vld [vmem:[#allocation8 + $0x30] sm:$0xff]
    %v120 = vld [vmem:[#allocation8 + $0x38] sm:$0xff]
    %v121 = vld [vmem:[#allocation8 + $0x40] sm:$0xff]
    %v122 = vld [vmem:[#allocation8 + $0x48] sm:$0xff]
    %v123 = vld [vmem:[#allocation8 + $0x50] sm:$0xff]
    %v124 = vld [vmem:[#allocation8 + $0x58] sm:$0xff]
    %v125 = vld [vmem:[#allocation8 + $0x60] sm:$0xff]
    %v126 = vld [vmem:[#allocation8 + $0x68] sm:$0xff]
    %v127 = vld [vmem:[#allocation8 + $0x70] sm:$0xff]
    %v128 = vld [vmem:[#allocation8 + $0x78] sm:$0xff]
    %129 = vmatpush.msra.mxu0 %v128
    %130 = vmatpush.msra.mxu0 %v127
    %131 = vmatpush.msra.mxu0 %v126
    %132 = vmatpush.msra.mxu0 %v125
    %133 = vmatpush.msra.mxu0 %v124
    %134 = vmatpush.msra.mxu0 %v123
    %135 = vmatpush.msra.mxu0 %v122
    %136 = vmatpush.msra.mxu0 %v121
    %137 = vmatpush.msra.mxu0 %v120
    %138 = vmatpush.msra.mxu0 %v119
    %139 = vmatpush.msra.mxu0 %v118
    %140 = vmatpush.msra.mxu0 %v117
    %141 = vmatpush.msra.mxu0 %v116
    %142 = vmatpush.msra.mxu0 %v115
    %143 = vmatpush.msra.mxu0 %v114
    %144 = vmatpush.msra.mxu0 %v113
    %145 = vmatmul.f32.gmra.mxu0 %v109
    %v146 = vpop.f32.mrf.mxu0
    %v147 = vadd.f32 0.0, %v146
    %148 = vmatmul.f32.gmra.mxu0 %v110
    %v149 = vpop.f32.mrf.mxu0
    %v150 = vadd.f32 0.0, %v149
    %151 = vdwg.mxu0
    %v152 = vadd.f32 %v111, %v147
    %v153 = vadd.f32 %v112, %v150
    %154 = vst [vmem:[#allocation2] sm:$0xff] %v152
    %155 = vst [vmem:[#allocation2 + $0x8] sm:$0xff] %v153
    // Predicated region
    $region30: #{tpu_custom_call.1} parent=1 // pred_check
      %p156 = pneg %p62
    $region31: #{tpu_custom_call.1} parent=1 // pred_check_branch
      %158 = sbr.rel (%p156) target = $region33
    $region32: #{tpu_custom_call.1} parent=1 // pred_region
      %v159 = vld [vmem:[#allocation2] sm:$0xff]
      %v160 = vld [vmem:[#allocation2 + $0x8] sm:$0xff]
      %v161 = vadd.f32 %v159, %v68
      %v162 = vadd.f32 %v160, %v69
      %163 = vadd.xlane.f32.xlu0 %v161
      %v164 = vpop.xlane.xlu0 %163
      %165 = vadd.xlane.f32.xlu0 %v162
      %v166 = vpop.xlane.xlu0 %165
      %v167 = vmul.f32 %v164, 0.03125
      %v168 = vmul.f32 %v166, 0.03125
      %v169 = vmul.f32 %v161, %v161
      %v170 = vmul.f32 %v162, %v162
      %171 = vadd.xlane.f32.xlu0 %v169
      %v172 = vpop.xlane.xlu0 %171
      %173 = vadd.xlane.f32.xlu0 %v170
      %v174 = vpop.xlane.xlu0 %173
      %v175 = vmul.f32 %v172, 0.03125
      %v176 = vmul.f32 %v174, 0.03125
      %v177 = vmul.f32 %v167, %v167
      %v178 = vmul.f32 %v168, %v168
      %v179 = vsub.f32 %v175, %v177
      %v180 = vsub.f32 %v176, %v178
      %v181 = vsub.f32 %v161, %v167
      %v182 = vsub.f32 %v162, %v168
      %v183 = vadd.f32 %v179, 1e-05
      %v184 = vadd.f32 %v180, 1e-05
      %v185 = vrsqrt.pop %v183
      %v186 = vmul.f32 %v185, %v183
      %v187 = vmul.f32 %v186, %v185
      %v188 = vmul.f32 0.5, %v187
      %v189 = vsub.f32 1.5, %v188
      %v190 = vmul.f32 %v185, %v189
      %vm191 = vweird.f32 %v183
      %vm192 = vweird.f32 %v185
      %vm193 = vmor %vm191, %vm192
      %v194 = vsel %vm193, %v185, %v190
      %v195 = vrsqrt.pop %v184
      %v196 = vmul.f32 %v195, %v184
      %v197 = vmul.f32 %v196, %v195
      %v198 = vmul.f32 0.5, %v197
      %v199 = vsub.f32 1.5, %v198
      %v200 = vmul.f32 %v195, %v199
      %vm201 = vweird.f32 %v184
      %vm202 = vweird.f32 %v195
      %vm203 = vmor %vm201, %vm202
      %v204 = vsel %vm203, %v195, %v200
      %v205 = vmul.f32 %v181, %v194
      %v206 = vmul.f32 %v182, %v204
      %207 = vst [vmem:[#allocation9] sm:$0xff] %v205
      %208 = vst [vmem:[#allocation9 + $0x8] sm:$0xff] %v206
    $region33: #{tpu_custom_call.1} parent=1 // pred_fallthru
      _
    // Predicated region
    $region34: #{tpu_custom_call.1} parent=1 // pred_check
      _
    $region35: #{tpu_custom_call.1} parent=1 // pred_check_branch
      %210 = sbr.rel (0) target = $region37
    $region36: #{tpu_custom_call.1} parent=1 // pred_region
      %212 = vsyncadd [#allocation5], 0
      %s213 = sshll.u32 [#allocation9], 4
      %s214 = int_to_ptr.vmem [resolvable:$true] %s213
      %s215 = sshll.u32 %s3, 4
      %s216 = int_to_ptr.hbm [resolvable:$true] %s215
      %221 = dma.vmem_to_hbm [thread:$0]  %s214, 256, %s216, [#allocation5], 128, 128, 8
    $region37: #{tpu_custom_call.1} parent=1 // pred_fallthru
      _
    // Predicated region
    $region38: #{tpu_custom_call.1} parent=1 // pred_check
      _
    $region39: #{tpu_custom_call.1} parent=1 // pred_check_branch
      %223 = sbr.rel (0) target = $region41
    $region40: #{tpu_custom_call.1} parent=1 // pred_region
      %225 = dma.done [#allocation5], 256
    $region41: #{tpu_custom_call.1} parent=1 // pred_fallthru
      _
    %226 = vsyncpa [#allocation4], 1
    %227 = vsyncpa [#allocation7], 1
    %228 = vsyncpa [#allocation5], 1

</llo_original>
